<compile_context>
chip_gen: v5e
topology: v5e:2x2
jax: 0.10.0
libtpu: 0.0.40
codegen_flags: <defaults>
</compile_context>

<pallas_src>
import functools
import math

import jax
import jax.numpy as jnp
from jax import lax
from jax.experimental import pallas as pl
from jax.experimental.pallas import tpu as pltpu

_SQRT_HALF = 1.0 / math.sqrt(2.0)


def _round_up(x, m):
    return (x + m - 1) // m * m


def _cdiv(a, b):
    return -(-a // b)


def _vmem_limit_bytes():
    """Generation-aware scoped-VMEM budget (v7x only has 64 MiB physical VMEM)."""
    try:
        cap = getattr(pltpu.get_tpu_info(), "vmem_capacity_bytes", None)
        if cap:
            return int(min(cap * 3 // 4, 100 * 1024 * 1024))
    except Exception:
        pass
    return 32 * 1024 * 1024  # conservative fallback (safe on v5e/v6e/v7x)


# ---------------------------------------------------------------------------
# Pass 1: conv (im2col matmul) -> per-core streaming per-channel sum / sum-sq.
# Only these tiny moment slabs cross HBM; the conv output is not materialized.
# ---------------------------------------------------------------------------
def _conv_stats_kernel(patches_ref, w_ref, stats_ref):
    @pl.when(pl.program_id(1) == 0)
    def _init():
        stats_ref[...] = jnp.zeros_like(stats_ref)

    # Conv2d (bias=False) for this M tile as one MXU matmul (f32 accumulation).
    y = jnp.dot(patches_ref[...], w_ref[...], preferred_element_type=jnp.float32)

    # Accumulate moments directly into this core's resident output slab
    # (rows 0/1 used; rows 2..7 are sublane-granule padding). Zero-padded M rows
    # contribute zeros, so the global statistics stay exact.
    stats_ref[0:1, :] += jnp.sum(y, axis=0, keepdims=True)
    stats_ref[1:2, :] += jnp.sum(y * y, axis=0, keepdims=True)


# ---------------------------------------------------------------------------
# Pass 2: recompute the cheap matmul, apply folded BN affine + GELU.
# ---------------------------------------------------------------------------
def _conv_affine_gelu_kernel(params_ref, patches_ref, w_ref, o_ref, *, approximate):
    y = jnp.dot(patches_ref[...], w_ref[...], preferred_element_type=jnp.float32)
    z = y * params_ref[0:1, :] + params_ref[1:2, :]
    if approximate:
        # tanh-approx GELU: routes the transcendental to the EUP (useful on v5e).
        c = 0.7978845608028654  # sqrt(2/pi)
        g = 0.5 * z * (1.0 + jnp.tanh(c * (z + 0.044715 * z * z * z)))
    else:
        # Exact erf GELU (PyTorch nn.GELU() default).
        g = 0.5 * z * (1.0 + lax.erf(z * _SQRT_HALF))
    o_ref[...] = g.astype(o_ref.dtype)


def conv2d_block_forward(x, weight, gamma, beta, *, stride=1, padding=0,
                         eps=1e-5, tile_m=512, mxu_dtype=jnp.bfloat16,
                         channels_last_out=False, approximate_gelu=False,
                         out_dtype=jnp.float32):
    """x: (N, C, H, W) f32, weight: (OC, C, KH, KW), gamma/beta: (OC,).

    Returns NCHW (PyTorch semantics) unless channels_last_out=True (NHWC, skipping
    the wrapper-side layout transpose for downstream NHWC consumers).
    """
    N, C, H, W = x.shape
    OC, Cw, KH, KW = weight.shape
    assert Cw == C

    # ---- glue: im2col in plain JAX (see TODO(synk) at top) ----
    xp = jnp.pad(x, ((0, 0), (0, 0), (padding, padding), (padding, padding)))
    Hp_, Wp_ = xp.shape[2], xp.shape[3]
    OH = (Hp_ - KH) // stride + 1
    OW = (Wp_ - KW) // stride + 1

    taps = []
    for i in range(KH):
        for j in range(KW):
            taps.append(xp[:, :, i:i + stride * OH:stride, j:j + stride * OW:stride])
    patches = jnp.stack(taps, axis=-1)                         # (N, C, OH, OW, KH*KW)
    patches = patches.transpose(0, 2, 3, 1, 4).reshape(N * OH * OW, C * KH * KW)

    M = N * OH * OW
    K = C * KH * KW                                            # NOT padded (lane pad is free on-chip)

    # OC lane padding: 128 normally, 256 granule for large OC (fills 2x256 MXU on v6e/v7x).
    OCp = _round_up(OC, 256 if OC >= 256 else 128)

    # Leading "parallel" core-split axis for pass 1 (2x on v7x; cheap loop elsewhere).
    n_split = 2

    # Tile M; shrink tile_m so Mp == M for small inputs (no padded rows / slice copy).
    row_granule = 16                                           # covers bf16 & f32 sublane packing
    tile_m = min(int(tile_m), _round_up(_cdiv(M, n_split), row_granule))
    tile_m = max(row_granule, _round_up(tile_m, row_granule))
    tiles_per_core = _cdiv(M, n_split * tile_m)
    n_tiles = n_split * tiles_per_core
    Mp = n_tiles * tile_m

    patches_p = patches.astype(mxu_dtype)
    if Mp > M:
        patches_p = jnp.pad(patches_p, ((0, Mp - M), (0, 0)))
    w_p = jnp.zeros((K, OCp), mxu_dtype).at[:, :OC].set(
        weight.reshape(OC, K).T.astype(mxu_dtype))

    vmem_limit = _vmem_limit_bytes()

    # ---- pass 1: per-core partial BN moments (sum / sum-of-squares) ----
    stats = pl.pallas_call(
        _conv_stats_kernel,
        out_shape=jax.ShapeDtypeStruct((n_split * 8, OCp), jnp.float32),
        grid=(n_split, tiles_per_core),
        in_specs=[
            pl.BlockSpec((tile_m, K), lambda c, i: (c * tiles_per_core + i, 0)),
            pl.BlockSpec((K, OCp), lambda c, i: (0, 0)),       # resident weights
        ],
        out_specs=pl.BlockSpec((8, OCp), lambda c, i: (c, 0)),  # per-core partial slab
        compiler_params=pltpu.CompilerParams(
            dimension_semantics=("parallel", "arbitrary"),
            vmem_limit_bytes=vmem_limit),
    )(patches_p, w_p)

    # ---- BN fold, computed once (not per tile) on the reduced partials ----
    moments = stats.reshape(n_split, 8, OCp).sum(axis=0)       # (8, OCp): rows 0=sum, 1=sumsq
    inv_m = 1.0 / float(M)
    mean = moments[0] * inv_m
    var = jnp.maximum(moments[1] * inv_m - mean * mean, 0.0)   # biased variance (train-mode BN)
    gamma_p = jnp.zeros((OCp,), jnp.float32).at[:OC].set(gamma.astype(jnp.float32))
    beta_p = jnp.zeros((OCp,), jnp.float32).at[:OC].set(beta.astype(jnp.float32))
    scale = gamma_p * lax.rsqrt(var + eps)
    shift = beta_p - mean * scale
    params = jnp.zeros((8, OCp), jnp.float32).at[0].set(scale).at[1].set(shift)

    # ---- pass 2: recompute cheap matmul, apply folded affine + GELU ----
    out_flat = pl.pallas_call(
        functools.partial(_conv_affine_gelu_kernel, approximate=approximate_gelu),
        out_shape=jax.ShapeDtypeStruct((Mp, OCp), out_dtype),
        grid=(n_tiles,),
        in_specs=[
            pl.BlockSpec((8, OCp), lambda i: (0, 0)),          # resident scale/shift
            pl.BlockSpec((tile_m, K), lambda i: (i, 0)),       # streamed patches
            pl.BlockSpec((K, OCp), lambda i: (0, 0)),          # resident weights
        ],
        out_specs=pl.BlockSpec((tile_m, OCp), lambda i: (i, 0)),  # lane-dense stores
        compiler_params=pltpu.CompilerParams(
            dimension_semantics=("parallel",),                 # megacore-sharded on v7x
            vmem_limit_bytes=vmem_limit),
    )(params, patches_p, w_p)

    out_nhwc = out_flat[:M, :OC].reshape(N, OH, OW, OC)
    if channels_last_out:
        return out_nhwc
    # Wrapper-side layout plumbing only to match PyTorch's NCHW return.
    return out_nhwc.transpose(0, 3, 1, 2)


def _reference(x, weight, gamma, beta, *, stride, padding, eps):
    y = lax.conv_general_dilated(
        x, weight, (stride, stride),
        [(padding, padding), (padding, padding)],
        dimension_numbers=('NCHW', 'OIHW', 'NCHW'))
    mean = y.mean(axis=(0, 2, 3), keepdims=True)
    var = ((y - mean) ** 2).mean(axis=(0, 2, 3), keepdims=True)
    yb = (y - mean) / jnp.sqrt(var + eps) * gamma[None, :, None, None] \
        + beta[None, :, None, None]
    return 0.5 * yb * (1.0 + lax.erf(yb / jnp.sqrt(2.0)))


if __name__ == "__main__":
    key = jax.random.PRNGKey(0)
    kx, kw = jax.random.split(key)

    # Small shapes consistent with Conv2dBlock(in=4, out=8, kernel=3, stride=1, padding=1)
    N, C, H, W = 2, 4, 16, 16
    OC, KH, KW = 8, 3, 3
    stride, padding = 1, 1

    x = jax.random.normal(kx, (N, C, H, W), dtype=jnp.float32)
    bound = 1.0 / math.sqrt(C * KH * KW)
    weight = jax.random.uniform(kw, (OC, C, KH, KW), dtype=jnp.float32,
                                minval=-bound, maxval=bound)
    gamma = jnp.ones((OC,), jnp.float32) + 0.1 * jnp.arange(OC, dtype=jnp.float32)
    beta = 0.05 * jnp.arange(OC, dtype=jnp.float32)

    ref = _reference(x, weight, gamma, beta, stride=stride, padding=padding, eps=1e-5)

    # f32 MXU path: tight numerical check against the f32 reference.
    out_f32 = conv2d_block_forward(x, weight, gamma, beta, stride=stride,
                                   padding=padding, eps=1e-5,
                                   mxu_dtype=jnp.float32)
    out_f32 = jax.block_until_ready(out_f32)
    assert out_f32.shape == (N, OC, H, W)
    assert jnp.allclose(out_f32, ref, atol=5e-4, rtol=5e-4), \
        f"f32 max abs err {jnp.max(jnp.abs(out_f32 - ref))}"

    # bf16 MXU path (default): looser tolerance from bf16 input rounding.
    out_bf16 = conv2d_block_forward(x, weight, gamma, beta, stride=stride,
                                    padding=padding, eps=1e-5,
                                    mxu_dtype=jnp.bfloat16)
    out_bf16 = jax.block_until_ready(out_bf16)
    assert out_bf16.shape == (N, OC, H, W)
    assert jnp.allclose(out_bf16, ref, atol=5e-2, rtol=5e-2), \
        f"bf16 max abs err {jnp.max(jnp.abs(out_bf16 - ref))}"

    print("KERNEL_OK")
</pallas_src>

<mosaic_0001>
module attributes {stable_mosaic.version = 11 : i64} {
  func.func @_conv_stats_kernel(%arg0: i32, %arg1: i32, %arg2: memref<256x36xf32, #tpu.memory_space<vmem>>, %arg3: memref<36x128xf32, #tpu.memory_space<vmem>>, %arg4: memref<8x128xf32, #tpu.memory_space<vmem>>) attributes {dimension_semantics = [#tpu.dimension_semantics<parallel>, #tpu.dimension_semantics<arbitrary>], iteration_bounds = array<i64: 2, 1>, scalar_prefetch = 0 : i64, scratch_operands = 0 : i64, tpu.core_type = #tpu.core_type<tc>, window_params = [{transform_indices = @transform_0, window_bounds = array<i64: 256, 36>}, {pipeline_mode = #tpu.pipeline_mode<synchronous>, transform_indices = @transform_1, window_bounds = array<i64: 36, 128>}, {transform_indices = @transform_2, window_bounds = array<i64: 8, 128>}]} {
    %c0_i32 = arith.constant 0 : i32
    %0 = arith.cmpi eq, %arg1, %c0_i32 : i32
    %1 = arith.extui %0 : i1 to i32
    %c0_i32_0 = arith.constant 0 : i32
    %2 = arith.cmpi ne, %1, %c0_i32_0 : i32
    scf.if %2 {
      %cst_13 = arith.constant 0.000000e+00 : f32
      %17 = vector.broadcast %cst_13 : f32 to vector<8x128xf32>
      %c0_14 = arith.constant 0 : index
      %c0_15 = arith.constant 0 : index
      %18 = vector.load %arg4[%c0_14, %c0_15] : memref<8x128xf32, #tpu.memory_space<vmem>>, vector<8x128xf32>
      tpu.vector_store %arg4[%c0_14, %c0_15], %17 {strides = array<i32>} : memref<8x128xf32, #tpu.memory_space<vmem>>, vector<8x128xf32>,
    } else {
    }
    %c0 = arith.constant 0 : index
    %c0_1 = arith.constant 0 : index
    %3 = vector.load %arg2[%c0, %c0_1] : memref<256x36xf32, #tpu.memory_space<vmem>>, vector<256x36xf32>
    %c0_2 = arith.constant 0 : index
    %c0_3 = arith.constant 0 : index
    %4 = vector.load %arg3[%c0_2, %c0_3] : memref<36x128xf32, #tpu.memory_space<vmem>>, vector<36x128xf32>
    %cst = arith.constant dense<0.000000e+00> : vector<256x128xf32>
    %5 = tpu.matmul %3, %4, %cst {dimension_numbers = #tpu.dot_dimension_numbers<[1], [0], [0], [1], [0, 0, 1, 1], [], []>} : vector<256x36xf32>, vector<36x128xf32>, vector<256x128xf32> -> vector<256x128xf32>
    %c0_4 = arith.constant 0 : index
    %c0_5 = arith.constant 0 : index
    %6 = vector.load %arg4[%c0_4, %c0_5] : memref<8x128xf32, #tpu.memory_space<vmem>>, vector<1x128xf32>
    %cst_6 = arith.constant dense<0.000000e+00> : vector<128xf32>
    %7 = vector.multi_reduction <add>, %5, %cst_6 [0] : vector<256x128xf32> to vector<128xf32>
    %8 = vector.shape_cast %7 : vector<128xf32> to vector<1x128xf32>
    %9 = arith.addf %6, %8 : vector<1x128xf32>
    %c0_7 = arith.constant 0 : index
    %c0_8 = arith.constant 0 : index
    %10 = vector.load %arg4[%c0_7, %c0_8] : memref<8x128xf32, #tpu.memory_space<vmem>>, vector<1x128xf32>
    tpu.vector_store %arg4[%c0_7, %c0_8], %9 {strides = array<i32>} : memref<8x128xf32, #tpu.memory_space<vmem>>, vector<1x128xf32>,
    %c1 = arith.constant 1 : index
    %c0_9 = arith.constant 0 : index
    %11 = vector.load %arg4[%c1, %c0_9] : memref<8x128xf32, #tpu.memory_space<vmem>>, vector<1x128xf32>
    %12 = arith.mulf %5, %5 : vector<256x128xf32>
    %cst_10 = arith.constant dense<0.000000e+00> : vector<128xf32>
    %13 = vector.multi_reduction <add>, %12, %cst_10 [0] : vector<256x128xf32> to vector<128xf32>
    %14 = vector.shape_cast %13 : vector<128xf32> to vector<1x128xf32>
    %15 = arith.addf %11, %14 : vector<1x128xf32>
    %c1_11 = arith.constant 1 : index
    %c0_12 = arith.constant 0 : index
    %16 = vector.load %arg4[%c1_11, %c0_12] : memref<8x128xf32, #tpu.memory_space<vmem>>, vector<1x128xf32>
    tpu.vector_store %arg4[%c1_11, %c0_12], %15 {strides = array<i32>} : memref<8x128xf32, #tpu.memory_space<vmem>>, vector<1x128xf32>,
    return
  }
  func.func @transform_0(%arg0: i32, %arg1: i32) -> (i32, i32) {
    %c1_i32 = arith.constant 1 : i32
    %0 = arith.muli %arg0, %c1_i32 : i32
    %1 = arith.addi %0, %arg1 : i32
    %c0_i32 = arith.constant 0 : i32
    %c0_i32_0 = arith.constant 0 : i32
    return %1, %c0_i32 : i32, i32
  }
  func.func @transform_1(%arg0: i32, %arg1: i32) -> (i32, i32) {
    %c0_i32 = arith.constant 0 : i32
    %c0_i32_0 = arith.constant 0 : i32
    %c0_i32_1 = arith.constant 0 : i32
    return %c0_i32, %c0_i32_0 : i32, i32
  }
  func.func @transform_2(%arg0: i32, %arg1: i32) -> (i32, i32) {
    %c0_i32 = arith.constant 0 : i32
    %c0_i32_0 = arith.constant 0 : i32
    return %arg0, %c0_i32 : i32, i32
  }
}

</mosaic_0001>

<llo_original>
// kernel: tpu_custom_call.1
$region0: #{tpu_custom_call.1}
  #allocation0 [shape = 'u32[]', space=smem, size = 0x4, offset = 0x4, fixed_abs, tag = 'smem constant byte address 0x4 - core index']
  #allocation1 [shape = 'u32[72,128]{1,0:T(1,128)}', space=vmem, size = 0x9000, scoped, tag = 'internal scratch']
  %s0 = inlined_call_operand.vmem [shape: f32[512,36], index: 0, kind: input, shape index: {}]
  %s1 = inlined_call_operand.vmem [shape: f32[36,128], index: 1, kind: input, shape index: {}]
  %s2 = inlined_call_operand.hbm [shape: f32[16,128], index: 2, kind: output, shape index: {}]
  %s3 = sld [smem:[#allocation0]]
  $region45: #{tpu_custom_call.1} parent=0
    _
  %s5 = ssub.s32 1, %s3
  %s6 = scalar_select 0, %s5, %s3
  $region1: #{tpu_custom_call.1} parent=0
    #allocation2 [shape = 'u8[8192]{0}', space=vmem, size = 0x2000, scoped, tag = 'output window, operand 0']
    #allocation3 [shape = 's32[2]{0}', space=sflag, size = 0x8, scoped, tag = 'scoped memory for tpu_custom_call.1']
    %7 = vsyncpa [#allocation3], 0
    %s8 = scalar_lea.sflag [#allocation3], 1
    %9 = vsyncpa %s8, 0
    loop: start=0, step=1, limit=4
    $region2: #{tpu_custom_call.1} parent=1 // loop_pre_header
      _
    $region3: #{tpu_custom_call.1} parent=1 // loop_header
      %s11 = sphi 0, %s15
      %p12 = scmp.ge.s32.totalorder %s11, 4
      %s18 = sphi 0, %s30
      %s19 = sphi 0, %s26
      %s20 = sphi 0, %s18
      %s21 = sphi 0, %s19
      %s22 = sphi 0, %s20
      %s23 = sphi 0, %s21
      %s35 = sphi 0, %s37
      %s38 = sphi 0, %s35
      %s39 = sphi 0, %s38
      %s55 = sphi 0, %s39
      %s59 = sphi 0, %s59
      %s61 = sphi 0, %s59
      %s62 = sphi 0, %s61
      %s76 = sphi 0, %s62
      %s82 = sphi 0, %s84
      %s85 = sphi 0, %s82
      %s86 = sphi 0, %s85
      %s102 = sphi 0, %s86
    $region4: #{tpu_custom_call.1} parent=1 // loop_header_branch
      %14 = sbr.rel (%p12) target = $region8
    $region5: #{tpu_custom_call.1} parent=1 // loop_body
      %s16 = ssub.s32 %s11, 1
      %s17 = ssub.s32 %s11, 2
      %s24 = sadd.s32 1, %s19
      %p25 = scmp.ge.s32.totalorder %s24, 1
      %s26 = scalar_select %p25, 0, %s24
      %s27 = sadd.s32 1, %s18
      %s28 = scalar_select %p25, %s27, %s18
      %p29 = scmp.ge.s32.totalorder %s28, 2
      %s30 = scalar_select %p29, 0, %s28
      %s31 = sadd.s32 %s18, %s19
      %s32 = sadd.s32 %s30, %s26
      %s33 = ssub.s32 %s31, %s32
      %p34 = scmp.eq.s32.totalorder %s33, 0
      %s36 = sadd.s32 %s35, 1
      %s37 = scalar_select %p34, %s35, %s36
      %p40 = pneg %p34
      %p41 = scmp.eq.s32.totalorder %s11, 1
      %p42 = por %p40, %p41
      %p43 = scmp.ne.s32.totalorder %s35, %s38
      %p44 = scmp.eq.s32.totalorder %s11, 0
      %p45 = por %p43, %p44
      %p46 = scmp.ne.s32.totalorder %s35, %s38
      %p47 = scmp.eq.s32.totalorder %s16, 1
      %p48 = por %p46, %p47
      %p49 = scmp.ne.s32.totalorder %s38, %s39
      %p50 = scmp.eq.s32.totalorder %s16, 0
      %p51 = por %p49, %p50
      %p52 = scmp.ne.s32.totalorder %s38, %s39
      %p53 = scmp.eq.s32.totalorder %s17, 1
      %p54 = por %p52, %p53
      %p56 = scmp.ne.s32.totalorder %s39, %s55
      %p57 = scmp.eq.s32.totalorder %s17, 0
      %p58 = por %p56, %p57
      %s60 = sadd.s32 %s59, 1
      %p63 = scmp.eq.s32.totalorder %s11, 1
      %p64 = scmp.ne.s32.totalorder %s59, %s61
      %p65 = scmp.eq.s32.totalorder %s11, 0
      %p66 = por %p64, %p65
      %p67 = scmp.ne.s32.totalorder %s59, %s61
      %p68 = scmp.eq.s32.totalorder %s16, 1
      %p69 = por %p67, %p68
      %p70 = scmp.ne.s32.totalorder %s61, %s62
      %p71 = scmp.eq.s32.totalorder %s16, 0
      %p72 = por %p70, %p71
      %p73 = scmp.ne.s32.totalorder %s61, %s62
      %p74 = scmp.eq.s32.totalorder %s17, 1
      %p75 = por %p73, %p74
      %p77 = scmp.ne.s32.totalorder %s62, %s76
      %p78 = scmp.eq.s32.totalorder %s17, 0
      %p79 = por %p77, %p78
      %s80 = ssub.s32 %s18, %s30
      %p81 = scmp.eq.s32.totalorder %s80, 0
      %s83 = sadd.s32 %s82, 1
      %s84 = scalar_select %p81, %s82, %s83
      %p87 = pneg %p81
      %p88 = scmp.eq.s32.totalorder %s11, 1
      %p89 = por %p87, %p88
      %p90 = scmp.ne.s32.totalorder %s82, %s85
      %p91 = scmp.eq.s32.totalorder %s11, 0
      %p92 = por %p90, %p91
      %p93 = scmp.ne.s32.totalorder %s82, %s85
      %p94 = scmp.eq.s32.totalorder %s16, 1
      %p95 = por %p93, %p94
      %p96 = scmp.ne.s32.totalorder %s85, %s86
      %p97 = scmp.eq.s32.totalorder %s16, 0
      %p98 = por %p96, %p97
      %p99 = scmp.ne.s32.totalorder %s85, %s86
      %p100 = scmp.eq.s32.totalorder %s17, 1
      %p101 = por %p99, %p100
      %p103 = scmp.ne.s32.totalorder %s86, %s102
      %p104 = scmp.eq.s32.totalorder %s17, 0
      %p105 = por %p103, %p104
      %p106 = scmp.le.s32.totalorder 1, %s11
      %p107 = scmp.lt.s32.totalorder %s11, 3
      %p108 = pnand %p106, %p107
      %p109 = pneg %p108
      // Predicated region
      $region9: #{tpu_custom_call.1} parent=5 // pred_check
        _
      $region10: #{tpu_custom_call.1} parent=5 // pred_check_branch
        %111 = sbr.rel (%p108) target = $region12
      $region11: #{tpu_custom_call.1} parent=5 // pred_region
        %s112 = ssub.s32 %s11, 1
        // Predicated region
        $region13: #{tpu_custom_call.1} parent=11 // pred_check
          %p113 = pneg %p72
        $region14: #{tpu_custom_call.1} parent=11 // pred_check_branch
          %115 = sbr.rel (%p113) target = $region16
        $region15: #{tpu_custom_call.1} parent=11 // pred_region
          _
        $region16: #{tpu_custom_call.1} parent=11 // pred_fallthru
          _
      $region12: #{tpu_custom_call.1} parent=5 // pred_fallthru
        _
      %p116 = scmp.lt.s32.totalorder %s11, 2
      // Predicated region
      $region17: #{tpu_custom_call.1} parent=5 // pred_check
        %p117 = pneg %p116
      $region18: #{tpu_custom_call.1} parent=5 // pred_check_branch
        %119 = sbr.rel (%p117) target = $region20
      $region19: #{tpu_custom_call.1} parent=5 // pred_region
        // Predicated region
        $region21: #{tpu_custom_call.1} parent=19 // pred_check
          %p120 = pneg %p45
        $region22: #{tpu_custom_call.1} parent=19 // pred_check_branch
          %122 = sbr.rel (%p120) target = $region24
        $region23: #{tpu_custom_call.1} parent=19 // pred_region
          %s123 = sadd.s32 %s18, %s19
          %s124 = smul.u32 32, %s123
          %p125 = scmp.lt.s32.totalorder %s124, 63
          %s126 = scalar_select %p125, %s124, 63
          %s127 = smul.addr %s126, 8
          %s128 = scalar_lea.vmem %s0, %s127
          %s129 = sadd.s32 %s18, %s19
          %s130 = smul.u32 32, %s129
        $region24: #{tpu_custom_call.1} parent=19 // pred_fallthru
          _
      $region20: #{tpu_custom_call.1} parent=5 // pred_fallthru
        _
      %p131 = scmp.le.s32.totalorder 1, %s11
      %p132 = scmp.lt.s32.totalorder %s11, 3
      %p133 = pnand %p131, %p132
      %p134 = pneg %p133
      // Predicated region
      $region25: #{tpu_custom_call.1} parent=5 // pred_check
        _
      $region26: #{tpu_custom_call.1} parent=5 // pred_check_branch
        %136 = sbr.rel (%p133) target = $region28
      $region27: #{tpu_custom_call.1} parent=5 // pred_region
        %s137 = ssub.s32 %s11, 1
        %s138 = sadd.s32 %s20, %s21
        %s139 = smul.u32 32, %s138
        %p140 = scmp.lt.s32.totalorder %s139, 63
        %s141 = scalar_select %p140, %s139, 63
        %s142 = smul.addr %s141, 8
        %s143 = scalar_lea.vmem %s0, %s142
        %p144 = pneg %p51
        %p145 = pneg %p48
        %p146 = pneg %p72
        %p147 = pneg %p69
        %p148 = pneg %p98
        %p149 = pneg %p95
        %s150 = sand.u32 %s85, 1
        %s151 = scalar_lea.sflag [#allocation3], %s150
        %s152 = sand.u32 %s85, 1
        %s153 = smul.addr %s152, 8
        %s154 = scalar_lea.vmem [#allocation2], %s153
        %s155 = sadd.s32 %s20, %s21
        %s156 = smul.u32 32, %s155
        %p157 = scmp.lt.s32.totalorder %s156, 63
        %s158 = scalar_select %p157, %s156, 63
        %s159 = smul.addr %s158, 8
        %s160 = scalar_lea.vmem %s0, %s159
        %s161 = sadd.s32 %s20, %s21
        %s162 = smul.u32 32, %s161
        %p163 = scmp.eq.s32.totalorder %s21, 0
        // Predicated region
        $region29: #{tpu_custom_call.1} parent=27 // pred_check
          %p164 = pneg %p163
        $region30: #{tpu_custom_call.1} parent=27 // pred_check_branch
          %166 = sbr.rel (%p164) target = $region32
        $region31: #{tpu_custom_call.1} parent=27 // pred_region
          %167 = vst [vmem:[%s154] sm:$0xff] 0.0
        $region32: #{tpu_custom_call.1} parent=27 // pred_fallthru
          _
        %v168 = vld [vmem:[%s160] sm:$0xff]
        %v169 = vld [vmem:[%s160 + $0x8] sm:$0xff]
        %v170 = vld [vmem:[%s160 + $0x10] sm:$0xff]
        %v171 = vld [vmem:[%s160 + $0x18] sm:$0xff]
        %v172 = vld [vmem:[%s160 + $0x20] sm:$0xff]
        %v173 = vld [vmem:[%s160 + $0x28] sm:$0xff]
        %v174 = vld [vmem:[%s160 + $0x30] sm:$0xff]
        %v175 = vld [vmem:[%s160 + $0x38] sm:$0xff]
        %v176 = vld [vmem:[%s160 + $0x40] sm:$0xff]
        %v177 = vld [vmem:[%s160 + $0x48] sm:$0xff]
        %v178 = vld [vmem:[%s160 + $0x50] sm:$0xff]
        %v179 = vld [vmem:[%s160 + $0x58] sm:$0xff]
        %v180 = vld [vmem:[%s160 + $0x60] sm:$0xff]
        %v181 = vld [vmem:[%s160 + $0x68] sm:$0xff]
        %v182 = vld [vmem:[%s160 + $0x70] sm:$0xff]
        %v183 = vld [vmem:[%s160 + $0x78] sm:$0xff]
        %v184 = vld [vmem:[%s160 + $0x80] sm:$0xff]
        %v185 = vld [vmem:[%s160 + $0x88] sm:$0xff]
        %v186 = vld [vmem:[%s160 + $0x90] sm:$0xff]
        %v187 = vld [vmem:[%s160 + $0x98] sm:$0xff]
        %v188 = vld [vmem:[%s160 + $0xa0] sm:$0xff]
        %v189 = vld [vmem:[%s160 + $0xa8] sm:$0xff]
        %v190 = vld [vmem:[%s160 + $0xb0] sm:$0xff]
        %v191 = vld [vmem:[%s160 + $0xb8] sm:$0xff]
        %v192 = vld [vmem:[%s160 + $0xc0] sm:$0xff]
        %v193 = vld [vmem:[%s160 + $0xc8] sm:$0xff]
        %v194 = vld [vmem:[%s160 + $0xd0] sm:$0xff]
        %v195 = vld [vmem:[%s160 + $0xd8] sm:$0xff]
        %v196 = vld [vmem:[%s160 + $0xe0] sm:$0xff]
        %v197 = vld [vmem:[%s160 + $0xe8] sm:$0xff]
        %v198 = vld [vmem:[%s160 + $0xf0] sm:$0xff]
        %v199 = vld [vmem:[%s160 + $0xf8] sm:$0xff]
        %v200 = vld [vmem:[%s1] sm:$0xff]
        %v201 = vld [vmem:[%s1 + $0x8] sm:$0xff]
        %v202 = vld [vmem:[%s1 + $0x10] sm:$0xff]
        %v203 = vld [vmem:[%s1 + $0x18] sm:$0xff]
        %v204 = vld [vmem:[%s1 + $0x20] sm:$0xf]
        %vm205 = vcmask 293888
        %v207 = vsel %vm205, %v168, 0
        %v210 = vsel %vm205, %v169, 0
        %v213 = vsel %vm205, %v170, 0
        %v216 = vsel %vm205, %v171, 0
        %v219 = vsel %vm205, %v172, 0
        %v222 = vsel %vm205, %v173, 0
        %v225 = vsel %vm205, %v174, 0
        %v228 = vsel %vm205, %v175, 0
        %v231 = vsel %vm205, %v176, 0
        %v234 = vsel %vm205, %v177, 0
        %v237 = vsel %vm205, %v178, 0
        %v240 = vsel %vm205, %v179, 0
        %v243 = vsel %vm205, %v180, 0
        %v246 = vsel %vm205, %v181, 0
        %v249 = vsel %vm205, %v182, 0
        %v252 = vsel %vm205, %v183, 0
        %v255 = vsel %vm205, %v184, 0
        %v258 = vsel %vm205, %v185, 0
        %v261 = vsel %vm205, %v186, 0
        %v264 = vsel %vm205, %v187, 0
        %v267 = vsel %vm205, %v188, 0
        %v270 = vsel %vm205, %v189, 0
        %v273 = vsel %vm205, %v190, 0
        %v276 = vsel %vm205, %v191, 0
        %v279 = vsel %vm205, %v192, 0
        %v282 = vsel %vm205, %v193, 0
        %v285 = vsel %vm205, %v194, 0
        %v288 = vsel %vm205, %v195, 0
        %v291 = vsel %vm205, %v196, 0
        %v294 = vsel %vm205, %v197, 0
        %v297 = vsel %vm205, %v198, 0
        %v300 = vsel %vm205, %v199, 0
        %vm302 = vcmask 1043456
        %v304 = vsel %vm302, %v204, 0
        %306 = vmatpush.msra.mxu0 0.0
        %307 = vmatpush.msra.mxu0 0.0
        %308 = vmatpush.msra.mxu0 0.0
        %309 = vmatpush.msra.mxu0 0.0
        %310 = vmatpush.msra.mxu0 0.0
        %311 = vmatpush.msra.mxu0 0.0
        %312 = vmatpush.msra.mxu0 0.0
        %313 = vmatpush.msra.mxu0 0.0
        %314 = vmatpush.msra.mxu0 0.0
        %315 = vmatpush.msra.mxu0 0.0
        %316 = vmatpush.msra.mxu0 0.0
        %317 = vmatpush.msra.mxu0 %v304
        %318 = vmatpush.msra.mxu0 %v203
        %319 = vmatpush.msra.mxu0 %v202
        %320 = vmatpush.msra.mxu0 %v201
        %321 = vmatpush.msra.mxu0 %v200
        %322 = vmatmul.f32.gmra.mxu0 %v207
        %v323 = vpop.f32.mrf.mxu0
        %v324 = vadd.f32 0.0, %v323
        %325 = vmatmul.f32.gmra.mxu0 %v210
        %v326 = vpop.f32.mrf.mxu0
        %v327 = vadd.f32 0.0, %v326
        %328 = vmatmul.f32.gmra.mxu0 %v213
        %v329 = vpop.f32.mrf.mxu0
        %v330 = vadd.f32 0.0, %v329
        %331 = vmatmul.f32.gmra.mxu0 %v216
        %v332 = vpop.f32.mrf.mxu0
        %v333 = vadd.f32 0.0, %v332
        %334 = vmatmul.f32.gmra.mxu0 %v219
        %v335 = vpop.f32.mrf.mxu0
        %v336 = vadd.f32 0.0, %v335
        %337 = vmatmul.f32.gmra.mxu0 %v222
        %v338 = vpop.f32.mrf.mxu0
        %v339 = vadd.f32 0.0, %v338
        %340 = vmatmul.f32.gmra.mxu0 %v225
        %v341 = vpop.f32.mrf.mxu0
        %v342 = vadd.f32 0.0, %v341
        %343 = vmatmul.f32.gmra.mxu0 %v228
        %v344 = vpop.f32.mrf.mxu0
        %v345 = vadd.f32 0.0, %v344
        %346 = vmatmul.f32.gmra.mxu0 %v231
        %v347 = vpop.f32.mrf.mxu0
        %v348 = vadd.f32 0.0, %v347
        %349 = vmatmul.f32.gmra.mxu0 %v234
        %v350 = vpop.f32.mrf.mxu0
        %v351 = vadd.f32 0.0, %v350
        %352 = vmatmul.f32.gmra.mxu0 %v237
        %v353 = vpop.f32.mrf.mxu0
        %v354 = vadd.f32 0.0, %v353
        %355 = vmatmul.f32.gmra.mxu0 %v240
        %v356 = vpop.f32.mrf.mxu0
        %v357 = vadd.f32 0.0, %v356
        %358 = vmatmul.f32.gmra.mxu0 %v243
        %v359 = vpop.f32.mrf.mxu0
        %v360 = vadd.f32 0.0, %v359
        %361 = vmatmul.f32.gmra.mxu0 %v246
        %v362 = vpop.f32.mrf.mxu0
        %v363 = vadd.f32 0.0, %v362
        %364 = vmatmul.f32.gmra.mxu0 %v249
        %v365 = vpop.f32.mrf.mxu0
        %v366 = vadd.f32 0.0, %v365
        %367 = vmatmul.f32.gmra.mxu0 %v252
        %v368 = vpop.f32.mrf.mxu0
        %v369 = vadd.f32 0.0, %v368
        %370 = vmatmul.f32.gmra.mxu0 %v255
        %v371 = vpop.f32.mrf.mxu0
        %v372 = vadd.f32 0.0, %v371
        %373 = vmatmul.f32.gmra.mxu0 %v258
        %v374 = vpop.f32.mrf.mxu0
        %v375 = vadd.f32 0.0, %v374
        %376 = vmatmul.f32.gmra.mxu0 %v261
        %v377 = vpop.f32.mrf.mxu0
        %v378 = vadd.f32 0.0, %v377
        %379 = vmatmul.f32.gmra.mxu0 %v264
        %v380 = vpop.f32.mrf.mxu0
        %v381 = vadd.f32 0.0, %v380
        %382 = vmatmul.f32.gmra.mxu0 %v267
        %v383 = vpop.f32.mrf.mxu0
        %v384 = vadd.f32 0.0, %v383
        %385 = vmatmul.f32.gmra.mxu0 %v270
        %v386 = vpop.f32.mrf.mxu0
        %v387 = vadd.f32 0.0, %v386
        %388 = vmatmul.f32.gmra.mxu0 %v273
        %v389 = vpop.f32.mrf.mxu0
        %v390 = vadd.f32 0.0, %v389
        %391 = vmatmul.f32.gmra.mxu0 %v276
        %v392 = vpop.f32.mrf.mxu0
        %v393 = vadd.f32 0.0, %v392
        %394 = vmatmul.f32.gmra.mxu0 %v279
        %v395 = vpop.f32.mrf.mxu0
        %v396 = vadd.f32 0.0, %v395
        %397 = vmatmul.f32.gmra.mxu0 %v282
        %v398 = vpop.f32.mrf.mxu0
        %v399 = vadd.f32 0.0, %v398
        %400 = vmatmul.f32.gmra.mxu0 %v285
        %v401 = vpop.f32.mrf.mxu0
        %v402 = vadd.f32 0.0, %v401
        %403 = vmatmul.f32.gmra.mxu0 %v288
        %v404 = vpop.f32.mrf.mxu0
        %v405 = vadd.f32 0.0, %v404
        %406 = vmatmul.f32.gmra.mxu0 %v291
        %v407 = vpop.f32.mrf.mxu0
        %v408 = vadd.f32 0.0, %v407
        %409 = vmatmul.f32.gmra.mxu0 %v294
        %v410 = vpop.f32.mrf.mxu0
        %v411 = vadd.f32 0.0, %v410
        %412 = vmatmul.f32.gmra.mxu0 %v297
        %v413 = vpop.f32.mrf.mxu0
        %v414 = vadd.f32 0.0, %v413
        %415 = vmatmul.f32.gmra.mxu0 %v300
        %v416 = vpop.f32.mrf.mxu0
        %v417 = vadd.f32 0.0, %v416
        %418 = vdwg.mxu0
        %v419 = vld [vmem:[%s154] sm:$0x1]
        %v420 = vadd.f32 %v324, %v327
        %v421 = vadd.f32 %v420, %v330
        %v422 = vadd.f32 %v421, %v333
        %v423 = vadd.f32 %v422, %v336
        %v424 = vadd.f32 %v423, %v339
        %v425 = vadd.f32 %v424, %v342
        %v426 = vadd.f32 %v425, %v345
        %v427 = vadd.f32 %v426, %v348
        %v428 = vadd.f32 %v427, %v351
        %v429 = vadd.f32 %v428, %v354
        %v430 = vadd.f32 %v429, %v357
        %v431 = vadd.f32 %v430, %v360
        %v432 = vadd.f32 %v431, %v363
        %v433 = vadd.f32 %v432, %v366
        %v434 = vadd.f32 %v433, %v369
        %v435 = vadd.f32 %v434, %v372
        %v436 = vadd.f32 %v435, %v375
        %v437 = vadd.f32 %v436, %v378
        %v438 = vadd.f32 %v437, %v381
        %v439 = vadd.f32 %v438, %v384
        %v440 = vadd.f32 %v439, %v387
        %v441 = vadd.f32 %v440, %v390
        %v442 = vadd.f32 %v441, %v393
        %v443 = vadd.f32 %v442, %v396
        %v444 = vadd.f32 %v443, %v399
        %v445 = vadd.f32 %v444, %v402
        %v446 = vadd.f32 %v445, %v405
        %v447 = vadd.f32 %v446, %v408
        %v448 = vadd.f32 %v447, %v411
        %v449 = vadd.f32 %v448, %v414
        %v450 = vadd.f32 %v449, %v417
        %v451 = vrot.slane %v450, 4
        %v452 = vadd.f32 %v450, %v451
        %v453 = vrot.slane %v452, 2
        %v454 = vadd.f32 %v452, %v453
        %v455 = vrot.slane %v454, 1
        %v456 = vadd.f32 %v454, %v455
        %v457 = vadd.f32 %v419, %v456
        %458 = vst [vmem:[%s154] sm:$0x1] %v457
        %v459 = vld [vmem:[%s154 + $0x1] sm:$0x1]
        %v460 = vmul.f32 %v324, %v324
        %v461 = vmul.f32 %v327, %v327
        %v462 = vmul.f32 %v330, %v330
        %v463 = vmul.f32 %v333, %v333
        %v464 = vmul.f32 %v336, %v336
        %v465 = vmul.f32 %v339, %v339
        %v466 = vmul.f32 %v342, %v342
        %v467 = vmul.f32 %v345, %v345
        %v468 = vmul.f32 %v348, %v348
        %v469 = vmul.f32 %v351, %v351
        %v470 = vmul.f32 %v354, %v354
        %v471 = vmul.f32 %v357, %v357
        %v472 = vmul.f32 %v360, %v360
        %v473 = vmul.f32 %v363, %v363
        %v474 = vmul.f32 %v366, %v366
        %v475 = vmul.f32 %v369, %v369
        %v476 = vmul.f32 %v372, %v372
        %v477 = vmul.f32 %v375, %v375
        %v478 = vmul.f32 %v378, %v378
        %v479 = vmul.f32 %v381, %v381
        %v480 = vmul.f32 %v384, %v384
        %v481 = vmul.f32 %v387, %v387
        %v482 = vmul.f32 %v390, %v390
        %v483 = vmul.f32 %v393, %v393
        %v484 = vmul.f32 %v396, %v396
        %v485 = vmul.f32 %v399, %v399
        %v486 = vmul.f32 %v402, %v402
        %v487 = vmul.f32 %v405, %v405
        %v488 = vmul.f32 %v408, %v408
        %v489 = vmul.f32 %v411, %v411
        %v490 = vmul.f32 %v414, %v414
        %v491 = vmul.f32 %v417, %v417
        %v492 = vadd.f32 %v460, %v461
        %v493 = vadd.f32 %v492, %v462
        %v494 = vadd.f32 %v493, %v463
        %v495 = vadd.f32 %v494, %v464
        %v496 = vadd.f32 %v495, %v465
        %v497 = vadd.f32 %v496, %v466
        %v498 = vadd.f32 %v497, %v467
        %v499 = vadd.f32 %v498, %v468
        %v500 = vadd.f32 %v499, %v469
        %v501 = vadd.f32 %v500, %v470
        %v502 = vadd.f32 %v501, %v471
        %v503 = vadd.f32 %v502, %v472
        %v504 = vadd.f32 %v503, %v473
        %v505 = vadd.f32 %v504, %v474
        %v506 = vadd.f32 %v505, %v475
        %v507 = vadd.f32 %v506, %v476
        %v508 = vadd.f32 %v507, %v477
        %v509 = vadd.f32 %v508, %v478
        %v510 = vadd.f32 %v509, %v479
        %v511 = vadd.f32 %v510, %v480
        %v512 = vadd.f32 %v511, %v481
        %v513 = vadd.f32 %v512, %v482
        %v514 = vadd.f32 %v513, %v483
        %v515 = vadd.f32 %v514, %v484
        %v516 = vadd.f32 %v515, %v485
        %v517 = vadd.f32 %v516, %v486
        %v518 = vadd.f32 %v517, %v487
        %v519 = vadd.f32 %v518, %v488
        %v520 = vadd.f32 %v519, %v489
        %v521 = vadd.f32 %v520, %v490
        %v522 = vadd.f32 %v521, %v491
        %v523 = vrot.slane %v522, 4
        %v524 = vadd.f32 %v522, %v523
        %v525 = vrot.slane %v524, 2
        %v526 = vadd.f32 %v524, %v525
        %v527 = vrot.slane %v526, 1
        %v528 = vadd.f32 %v526, %v527
        %v529 = vadd.f32 %v459, %v528
        %530 = vst [vmem:[%s154 + $0x1] sm:$0x1] %v529
        %s531 = sand.u32 %s85, 1
        %s532 = scalar_lea.sflag [#allocation3], %s531
        %s533 = sand.u32 %s85, 1
        %s534 = smul.addr %s533, 8
        %s535 = scalar_lea.vmem [#allocation2], %s534
        // Predicated region
        $region33: #{tpu_custom_call.1} parent=27 // pred_check
          %p536 = pneg %p95
        $region34: #{tpu_custom_call.1} parent=27 // pred_check_branch
          %538 = sbr.rel (%p536) target = $region36
        $region35: #{tpu_custom_call.1} parent=27 // pred_region
          %540 = vsyncadd %s532, 0
          %s541 = smul.addr %s20, 8
          %s542 = scalar_lea.hbm %s2, %s541
          %s544 = sshll.u32 %s535, 4
          %s545 = int_to_ptr.vmem [resolvable:$true] %s544
          %s546 = sshll.u32 %s542, 4
          %s547 = int_to_ptr.hbm [resolvable:$true] %s546
          %549 = dma.vmem_to_hbm [thread:$0]  %s545, 128, %s547, %s532
        $region36: #{tpu_custom_call.1} parent=27 // pred_fallthru
          _
      $region28: #{tpu_custom_call.1} parent=5 // pred_fallthru
        _
      %p550 = scmp.le.s32.totalorder 2, %s11
      // Predicated region
      $region37: #{tpu_custom_call.1} parent=5 // pred_check
        %p551 = pneg %p550
      $region38: #{tpu_custom_call.1} parent=5 // pred_check_branch
        %553 = sbr.rel (%p551) target = $region40
      $region39: #{tpu_custom_call.1} parent=5 // pred_region
        %s554 = ssub.s32 %s11, 2
        // Predicated region
        $region41: #{tpu_custom_call.1} parent=39 // pred_check
          %p555 = pneg %p101
        $region42: #{tpu_custom_call.1} parent=39 // pred_check_branch
          %557 = sbr.rel (%p555) target = $region44
        $region43: #{tpu_custom_call.1} parent=39 // pred_region
          %s558 = sand.u32 %s86, 1
          %s559 = scalar_lea.sflag [#allocation3], %s558
          %s560 = sand.u32 %s86, 1
          %s561 = smul.addr %s560, 8
          %s562 = scalar_lea.vmem [#allocation2], %s561
          %564 = dma.done %s559, 128
        $region44: #{tpu_custom_call.1} parent=39 // pred_fallthru
          _
      $region40: #{tpu_custom_call.1} parent=5 // pred_fallthru
        _
    $region6: #{tpu_custom_call.1} parent=1 // loop_footer
      %s15 = sadd.s32 1, %s11
    $region7: #{tpu_custom_call.1} parent=1 // loop_footer_branch
      %10 = sbr.rel target = $region3
    $region8: #{tpu_custom_call.1} parent=1 // loop_exit
      _
    %565 = vsyncpa [#allocation3], 1
    %s566 = scalar_lea.sflag [#allocation3], 1
    %567 = vsyncpa %s566, 1

</llo_original>
